<compile_context>
chip_gen: v7x
topology: tpu7x:2x2x1
jax: 0.10.0
libtpu: 0.0.40
codegen_flags: <defaults>
</compile_context>

<pallas_src>
import functools

import jax
import jax.numpy as jnp
from jax.experimental import pallas as pl
from jax.experimental.pallas import tpu as pltpu


def _linear_model_kernel(w_ref, x_ref, o_ref, acc_ref, *, tf):
    """One grid step (i over B-tiles, j over N-tiles, kf over F-tiles).

    w_ref  : SMEM (F,) float32       -- full weight vector, resident
    x_ref  : VMEM (tb, tf, tn)       -- input tile
    o_ref  : VMEM (tb, tn)           -- output tile (revisited across kf)
    acc_ref: VMEM (tb, tn) float32   -- accumulator scratch
    """
    kf = pl.program_id(2)

    @pl.when(kf == 0)
    def _():
        acc_ref[...] = jnp.zeros_like(acc_ref)

    f_base = kf * tf
    acc = acc_ref[...]
    # Unrolled VALU accumulation: each feature slab (tb, tn) is scaled by a
    # scalar weight read from SMEM (splat).  Keeps the reduction off the XLU
    # and avoids materializing the full (tb, tf, tn) product.
    for f in range(tf):
        acc = acc + x_ref[:, f, :].astype(jnp.float32) * w_ref[f_base + f]
    acc_ref[...] = acc

    @pl.when(kf == pl.num_programs(2) - 1)
    def _():
        o_ref[...] = acc_ref[...].astype(o_ref.dtype)


def _pick_tile(dim, preferred, align):
    """Largest tile <= `preferred` that is either the full dim or an `align`
    multiple that divides `dim` exactly (keeps every block full, so no padded
    data ever feeds the accumulator and blocks satisfy the (8,128) rule)."""
    if dim <= preferred:
        return dim
    t = (preferred // align) * align
    while t >= align:
        if dim % t == 0:
            return t
        t -= align
    return dim  # no aligned divisor: fall back to the full dimension


def linear_model_forward(x, weights):
    """x: (B, F, N), weights: (1, F, 1) or (F,)  ->  y: (B, N)."""
    B, F, N = x.shape
    w_flat = jnp.asarray(weights, dtype=jnp.float32).reshape(F)

    # Tile sizes: lane axis (N) wants >=128-wide (ideally 512) tiles for dense
    # DMA / unmasked stores; F slabs stay small (bounded unroll of VALU adds);
    # B tiles sized so a double-buffered x block stays well inside the 32 MiB
    # scoped-VMEM budget shared by v5e / v6e / v7x.
    tn = _pick_tile(N, 512, 128)
    tb = _pick_tile(B, 256, 8)
    tf = _pick_tile(F, 8, 8)

    grid = (B // tb, N // tn, F // tf)

    kernel = functools.partial(_linear_model_kernel, tf=tf)

    itemsize = x.dtype.itemsize
    cost = pl.CostEstimate(
        flops=2 * B * F * N,
        transcendentals=0,
        bytes_accessed=B * F * N * itemsize + F * 4 + B * N * itemsize,
    )

    return pl.pallas_call(
        kernel,
        out_shape=jax.ShapeDtypeStruct((B, N), x.dtype),
        grid=grid,
        in_specs=[
            # Full weight vector, resident in SMEM (cheap scalar reads).
            pl.BlockSpec(memory_space=pltpu.MemorySpace.SMEM),
            # x tile: (tb, tf, tn); the F (reduction) axis is the last grid axis.
            pl.BlockSpec((tb, tf, tn), lambda i, j, k: (i, k, j)),
        ],
        # Same output block for every kf -> output stays resident (accumulator).
        out_specs=pl.BlockSpec((tb, tn), lambda i, j, k: (i, j)),
        scratch_shapes=[pltpu.VMEM((tb, tn), jnp.float32)],
        compiler_params=pltpu.CompilerParams(
            dimension_semantics=("parallel", "parallel", "arbitrary"),
            vmem_limit_bytes=32 * 1024 * 1024,
        ),
        cost_estimate=cost,
    )(w_flat, x)


def init_linear_model_weights(key, num_features, dtype=jnp.float32):
    """Deterministic init matching LinearModel.__init__ semantics."""
    bound = 1.0 / jnp.sqrt(jnp.asarray(num_features, dtype))
    u = jax.random.uniform(key, (1, num_features, 1), dtype=dtype)  # ~ torch.rand
    return -bound + u * (2.0 * bound)


if __name__ == "__main__":
    key = jax.random.PRNGKey(0)
    k_w, k_x, k_w2, k_x2 = jax.random.split(key, 4)

    # Small demo shape consistent with the module: (batch, num_features, N).
    B, F, N = 2, 4, 16
    weights = init_linear_model_weights(k_w, F)               # (1, F, 1)
    x = jax.random.normal(k_x, (B, F, N), dtype=jnp.float32)  # (B, F, N)

    y = linear_model_forward(x, weights)
    y = jax.block_until_ready(y)
    y_ref = jnp.sum(x * weights, axis=1)
    assert y.shape == (B, N)
    assert jnp.allclose(y, y_ref, atol=1e-5, rtol=1e-5)

    # Second (still small) shape that exercises the tiled/accumulating path:
    # grid = (1, 2, 2) -> multiple N tiles and multiple F reduction steps.
    B2, F2, N2 = 16, 16, 1024
    weights2 = init_linear_model_weights(k_w2, F2)
    x2 = jax.random.normal(k_x2, (B2, F2, N2), dtype=jnp.float32)
    y2 = jax.block_until_ready(linear_model_forward(x2, weights2))
    y2_ref = jnp.sum(x2 * weights2, axis=1)
    assert y2.shape == (B2, N2)
    assert jnp.allclose(y2, y2_ref, atol=1e-4, rtol=1e-5)

    print("KERNEL_OK")
</pallas_src>

<mosaic_0001>
module attributes {stable_mosaic.version = 11 : i64} {
  func.func @_linear_model_kernel(%arg0: i32, %arg1: i32, %arg2: i32, %arg3: memref<4xf32, #tpu.memory_space<smem>>, %arg4: memref<2x4x16xf32, #tpu.memory_space<vmem>>, %arg5: memref<2x16xf32, #tpu.memory_space<vmem>>, %arg6: memref<2x16xf32, #tpu.memory_space<vmem>>) attributes {dimension_semantics = [#tpu.dimension_semantics<parallel>, #tpu.dimension_semantics<parallel>, #tpu.dimension_semantics<arbitrary>], iteration_bounds = array<i64: 1, 1, 1>, scalar_prefetch = 0 : i64, scratch_operands = 1 : i64, tpu.core_type = #tpu.core_type<tc>, window_params = [{transform_indices = @transform_0, window_bounds = array<i64: 4>}, {transform_indices = @transform_1, window_bounds = array<i64: 2, 4, 16>}, {transform_indices = @transform_2, window_bounds = array<i64: 2, 16>}]} {
    %c0_i32 = arith.constant 0 : i32
    %0 = arith.cmpi eq, %arg2, %c0_i32 : i32
    %1 = arith.extui %0 : i1 to i32
    %c0_i32_0 = arith.constant 0 : i32
    %2 = arith.cmpi ne, %1, %c0_i32_0 : i32
    scf.if %2 {
      %cst = arith.constant 0.000000e+00 : f32
      %41 = vector.broadcast %cst : f32 to vector<2x16xf32>
      %c0_16 = arith.constant 0 : index
      %c0_17 = arith.constant 0 : index
      %42 = vector.load %arg6[%c0_16, %c0_17] : memref<2x16xf32, #tpu.memory_space<vmem>>, vector<2x16xf32>
      tpu.vector_store %arg6[%c0_16, %c0_17], %41 {strides = array<i32>} : memref<2x16xf32, #tpu.memory_space<vmem>>, vector<2x16xf32>,
    } else {
    }
    %c4_i32 = arith.constant 4 : i32
    %3 = arith.muli %arg2, %c4_i32 : i32
    %c0 = arith.constant 0 : index
    %c0_1 = arith.constant 0 : index
    %4 = vector.load %arg6[%c0, %c0_1] : memref<2x16xf32, #tpu.memory_space<vmem>>, vector<2x16xf32>
    %c0_2 = arith.constant 0 : index
    %c0_3 = arith.constant 0 : index
    %c0_4 = arith.constant 0 : index
    %5 = vector.load %arg4[%c0_2, %c0_3, %c0_4] : memref<2x4x16xf32, #tpu.memory_space<vmem>>, vector<2x1x16xf32>
    %6 = vector.shape_cast %5 : vector<2x1x16xf32> to vector<2x16xf32>
    %c0_i32_5 = arith.constant 0 : i32
    %7 = arith.addi %3, %c0_i32_5 : i32
    %8 = arith.index_cast %7 : i32 to index
    %9 = memref.load %arg3[%8] : memref<4xf32, #tpu.memory_space<smem>>
    %10 = vector.broadcast %9 : f32 to vector<2x16xf32>
    %11 = arith.mulf %6, %10 : vector<2x16xf32>
    %12 = arith.addf %4, %11 : vector<2x16xf32>
    %c0_6 = arith.constant 0 : index
    %c1 = arith.constant 1 : index
    %c0_7 = arith.constant 0 : index
    %13 = vector.load %arg4[%c0_6, %c1, %c0_7] : memref<2x4x16xf32, #tpu.memory_space<vmem>>, vector<2x1x16xf32>
    %14 = vector.shape_cast %13 : vector<2x1x16xf32> to vector<2x16xf32>
    %c1_i32 = arith.constant 1 : i32
    %15 = arith.addi %3, %c1_i32 : i32
    %16 = arith.index_cast %15 : i32 to index
    %17 = memref.load %arg3[%16] : memref<4xf32, #tpu.memory_space<smem>>
    %18 = vector.broadcast %17 : f32 to vector<2x16xf32>
    %19 = arith.mulf %14, %18 : vector<2x16xf32>
    %20 = arith.addf %12, %19 : vector<2x16xf32>
    %c0_8 = arith.constant 0 : index
    %c2 = arith.constant 2 : index
    %c0_9 = arith.constant 0 : index
    %21 = vector.load %arg4[%c0_8, %c2, %c0_9] : memref<2x4x16xf32, #tpu.memory_space<vmem>>, vector<2x1x16xf32>
    %22 = vector.shape_cast %21 : vector<2x1x16xf32> to vector<2x16xf32>
    %c2_i32 = arith.constant 2 : i32
    %23 = arith.addi %3, %c2_i32 : i32
    %24 = arith.index_cast %23 : i32 to index
    %25 = memref.load %arg3[%24] : memref<4xf32, #tpu.memory_space<smem>>
    %26 = vector.broadcast %25 : f32 to vector<2x16xf32>
    %27 = arith.mulf %22, %26 : vector<2x16xf32>
    %28 = arith.addf %20, %27 : vector<2x16xf32>
    %c0_10 = arith.constant 0 : index
    %c3 = arith.constant 3 : index
    %c0_11 = arith.constant 0 : index
    %29 = vector.load %arg4[%c0_10, %c3, %c0_11] : memref<2x4x16xf32, #tpu.memory_space<vmem>>, vector<2x1x16xf32>
    %30 = vector.shape_cast %29 : vector<2x1x16xf32> to vector<2x16xf32>
    %c3_i32 = arith.constant 3 : i32
    %31 = arith.addi %3, %c3_i32 : i32
    %32 = arith.index_cast %31 : i32 to index
    %33 = memref.load %arg3[%32] : memref<4xf32, #tpu.memory_space<smem>>
    %34 = vector.broadcast %33 : f32 to vector<2x16xf32>
    %35 = arith.mulf %30, %34 : vector<2x16xf32>
    %36 = arith.addf %28, %35 : vector<2x16xf32>
    %c0_12 = arith.constant 0 : index
    %c0_13 = arith.constant 0 : index
    %37 = vector.load %arg6[%c0_12, %c0_13] : memref<2x16xf32, #tpu.memory_space<vmem>>, vector<2x16xf32>
    tpu.vector_store %arg6[%c0_12, %c0_13], %36 {strides = array<i32>} : memref<2x16xf32, #tpu.memory_space<vmem>>, vector<2x16xf32>,
    %c0_i32_14 = arith.constant 0 : i32
    %38 = arith.cmpi eq, %arg2, %c0_i32_14 : i32
    %39 = arith.extui %38 : i1 to i32
    %c0_i32_15 = arith.constant 0 : i32
    %40 = arith.cmpi ne, %39, %c0_i32_15 : i32
    scf.if %40 {
      %c0_16 = arith.constant 0 : index
      %c0_17 = arith.constant 0 : index
      %41 = vector.load %arg6[%c0_16, %c0_17] : memref<2x16xf32, #tpu.memory_space<vmem>>, vector<2x16xf32>
      %c0_18 = arith.constant 0 : index
      %c0_19 = arith.constant 0 : index
      %42 = vector.load %arg5[%c0_18, %c0_19] : memref<2x16xf32, #tpu.memory_space<vmem>>, vector<2x16xf32>
      tpu.vector_store %arg5[%c0_18, %c0_19], %41 {strides = array<i32>} : memref<2x16xf32, #tpu.memory_space<vmem>>, vector<2x16xf32>,
    } else {
    }
    return
  }
  func.func @transform_0(%arg0: i32, %arg1: i32, %arg2: i32) -> i32 {
    %c0_i32 = arith.constant 0 : i32
    %c0_i32_0 = arith.constant 0 : i32
    return %c0_i32 : i32
  }
  func.func @transform_1(%arg0: i32, %arg1: i32, %arg2: i32) -> (i32, i32, i32) {
    %c0_i32 = arith.constant 0 : i32
    return %arg0, %arg2, %arg1 : i32, i32, i32
  }
  func.func @transform_2(%arg0: i32, %arg1: i32, %arg2: i32) -> (i32, i32) {
    %c0_i32 = arith.constant 0 : i32
    return %arg0, %arg1 : i32, i32
  }
}

</mosaic_0001>

<llo_original>
// kernel: tpu_custom_call.1
$region0: #{tpu_custom_call.1}
  #allocation0 [shape = 'u32[]', space=smem, size = 0x4, offset = 0x4, fixed_abs, tag = 'smem constant byte address 0x4 - core index']
  #allocation1 [shape = 'u32[144,128]{1,0:T(1,128)}', space=vmem, size = 0x12000, scoped, tag = 'internal scratch']
  #allocation2 [shape = 'f32[2,16]{1,0:T(2,128)}', space=vmem, size = 0x400, scoped, tag = 'scratch operand']
  %s0 = inlined_call_operand.hbm [shape: f32[4], index: 0, kind: input, shape index: {}]
  %s1 = inlined_call_operand.hbm [shape: f32[2,4,16], index: 1, kind: input, shape index: {}]
  %s2 = inlined_call_operand.hbm [shape: f32[2,16], index: 2, kind: output, shape index: {}]
  %s3 = sld [smem:[#allocation0]]
  $region34: #{tpu_custom_call.1} parent=0
    _
  %s5 = ssub.s32 1, %s3
  %s6 = scalar_select 0, %s5, %s3
  $region1: #{tpu_custom_call.1} parent=0
    #allocation3 [shape = 'u8[512]{0}', space=smem, size = 0x200, scoped, tag = 'input window, operand 0, single buffered']
    #allocation4 [shape = 's32[1]{0}', space=sflag, size = 0x4, scoped, tag = 'scoped memory for tpu_custom_call.1']
    #allocation5 [shape = 's32[1]{0}', space=sflag, size = 0x4, scoped, tag = 'scoped memory for tpu_custom_call.1']
    #allocation6 [shape = 's32[1]{0}', space=sflag, size = 0x4, scoped, tag = 'scoped memory for tpu_custom_call.1']
    #allocation7 [shape = 'u8[4096]{0}', space=vmem, size = 0x1000, scoped, tag = 'input window, operand 1, single buffered']
    #allocation8 [shape = 'u8[1024]{0}', space=vmem, size = 0x400, scoped, tag = 'output window, operand 0, single buffered']
    %7 = vsyncpa [#allocation6], 0
    %8 = vsyncpa [#allocation4], 0
    %9 = vsyncpa [#allocation5], 0
    // Predicated region
    $region2: #{tpu_custom_call.1} parent=1 // pred_check
      _
    $region3: #{tpu_custom_call.1} parent=1 // pred_check_branch
      %11 = sbr.rel (0) target = $region5
    $region4: #{tpu_custom_call.1} parent=1 // pred_region
      %s13 = ssub.s32 16, 16
      %14 = vsyncadd [#allocation6], %s13
      %17 = dma.hbm_to_smem %s0, 16, [#allocation3], [#allocation6]
    $region5: #{tpu_custom_call.1} parent=1 // pred_fallthru
      _
    // Predicated region
    $region6: #{tpu_custom_call.1} parent=1 // pred_check
      _
    $region7: #{tpu_custom_call.1} parent=1 // pred_check_branch
      %19 = sbr.rel (0) target = $region9
    $region8: #{tpu_custom_call.1} parent=1 // pred_region
      %s21 = ssub.s32 128, 128
      %22 = vsyncadd [#allocation4], %s21
      %s23 = sshll.u32 [#allocation7], 4
      %s24 = int_to_ptr.vmem [resolvable:$true] %s23
      %29 = dma.hbm_to_vmem [thread:$0]  %s1, 128, %s24, [#allocation4], 64, 64, 4
    $region9: #{tpu_custom_call.1} parent=1 // pred_fallthru
      _
    // Predicated region
    $region10: #{tpu_custom_call.1} parent=1 // pred_check
      _
    $region11: #{tpu_custom_call.1} parent=1 // pred_check_branch
      %31 = sbr.rel (0) target = $region13
    $region12: #{tpu_custom_call.1} parent=1 // pred_region
      %32 = dma.done [#allocation6], 16
    $region13: #{tpu_custom_call.1} parent=1 // pred_fallthru
      _
    // Predicated region
    $region14: #{tpu_custom_call.1} parent=1 // pred_check
      _
    $region15: #{tpu_custom_call.1} parent=1 // pred_check_branch
      %34 = sbr.rel (0) target = $region17
    $region16: #{tpu_custom_call.1} parent=1 // pred_region
      %35 = dma.done [#allocation4], 128
    $region17: #{tpu_custom_call.1} parent=1 // pred_fallthru
      _
    %36 = sfence
    %p37 = scmp.eq.s32.totalorder 0, 0
    // Predicated region
    $region18: #{tpu_custom_call.1} parent=1 // pred_check
      %p38 = pneg %p37
    $region19: #{tpu_custom_call.1} parent=1 // pred_check_branch
      %40 = sbr.rel (%p38) target = $region21
    $region20: #{tpu_custom_call.1} parent=1 // pred_region
      %vm41 = vcmask 123904
      %42 = vst.msk [vmem:[#allocation2] sm:$0x3] %vm41, 0.0
    $region21: #{tpu_custom_call.1} parent=1 // pred_fallthru
      _
    %s43 = smul.u32 0, 4
    %v44 = vld [vmem:[#allocation2] sm:$0x3]
    %v45 = vld [vmem:[#allocation7] sm:$0x1]
    %v46 = vld [vmem:[#allocation7 + $0x4] sm:$0x1]
    %s47 = sld [smem:[#allocation3 + %s43]]
    %v48 = vstv %s47
    %v49 = vmul.f32 %v45, %v48
    %v50 = vmul.f32 %v46, %v48
    %v53 = vrot.slane %v50, 7
    %vm54 = vcmask 1041409
    %v55 = vsel %vm54, %v53, %v49
    %v57 = vadd.f32 %v44, %v55
    %v58 = vld [vmem:[#allocation7 + $0x1] sm:$0x1]
    %v59 = vld [vmem:[#allocation7 + $0x5] sm:$0x1]
    %s60 = sadd.s32 %s43, 1
    %s61 = sld [smem:[#allocation3 + %s60]]
    %v62 = vstv %s61
    %v63 = vmul.f32 %v58, %v62
    %v64 = vmul.f32 %v59, %v62
    %v67 = vrot.slane %v64, 7
    %v68 = vsel %vm54, %v67, %v63
    %v70 = vadd.f32 %v57, %v68
    %v71 = vld [vmem:[#allocation7 + $0x2] sm:$0x1]
    %v72 = vld [vmem:[#allocation7 + $0x6] sm:$0x1]
    %s73 = sadd.s32 %s43, 2
    %s74 = sld [smem:[#allocation3 + %s73]]
    %v75 = vstv %s74
    %v76 = vmul.f32 %v71, %v75
    %v77 = vmul.f32 %v72, %v75
    %v80 = vrot.slane %v77, 7
    %v81 = vsel %vm54, %v80, %v76
    %v83 = vadd.f32 %v70, %v81
    %v84 = vld [vmem:[#allocation7 + $0x3] sm:$0x1]
    %v85 = vld [vmem:[#allocation7 + $0x7] sm:$0x1]
    %s86 = sadd.s32 %s43, 3
    %s87 = sld [smem:[#allocation3 + %s86]]
    %v88 = vstv %s87
    %v89 = vmul.f32 %v84, %v88
    %v90 = vmul.f32 %v85, %v88
    %v93 = vrot.slane %v90, 7
    %v94 = vsel %vm54, %v93, %v89
    %v96 = vadd.f32 %v83, %v94
    %vm97 = vcmask 123904
    %98 = vst.msk [vmem:[#allocation2] sm:$0x3] %vm97, %v96
    // Predicated region
    $region22: #{tpu_custom_call.1} parent=1 // pred_check
      %p99 = pneg %p37
    $region23: #{tpu_custom_call.1} parent=1 // pred_check_branch
      %101 = sbr.rel (%p99) target = $region25
    $region24: #{tpu_custom_call.1} parent=1 // pred_region
      %v102 = vld [vmem:[#allocation2] sm:$0x3]
      %103 = vst.msk [vmem:[#allocation8] sm:$0x3] %vm97, %v102
    $region25: #{tpu_custom_call.1} parent=1 // pred_fallthru
      _
    // Predicated region
    $region26: #{tpu_custom_call.1} parent=1 // pred_check
      _
    $region27: #{tpu_custom_call.1} parent=1 // pred_check_branch
      %105 = sbr.rel (0) target = $region29
    $region28: #{tpu_custom_call.1} parent=1 // pred_region
      %s107 = ssub.s32 32, 32
      %108 = vsyncadd [#allocation5], %s107
      %s110 = sshll.u32 [#allocation8], 4
      %s111 = int_to_ptr.vmem [resolvable:$true] %s110
      %113 = dma.vmem_to_hbm [thread:$0]  %s111, 32, %s2, [#allocation5]
    $region29: #{tpu_custom_call.1} parent=1 // pred_fallthru
      _
    // Predicated region
    $region30: #{tpu_custom_call.1} parent=1 // pred_check
      _
    $region31: #{tpu_custom_call.1} parent=1 // pred_check_branch
      %115 = sbr.rel (0) target = $region33
    $region32: #{tpu_custom_call.1} parent=1 // pred_region
      %116 = dma.done [#allocation5], 32
    $region33: #{tpu_custom_call.1} parent=1 // pred_fallthru
      _
    %117 = vsyncpa [#allocation4], 1
    %118 = vsyncpa [#allocation5], 1
    %119 = vsyncpa [#allocation6], 1

</llo_original>
